<compile_context>
chip_gen: v6e
topology: v6e:2x2x1
jax: 0.10.0
libtpu: 0.0.40
codegen_flags: <defaults>
</compile_context>

<pallas_src>
import functools

import jax
import jax.numpy as jnp
import numpy as np
from jax.experimental import pallas as pl
from jax.experimental.pallas import tpu as pltpu


def _attn_kernel(x_ref, wqkv_ref, wo_ref, bo_ref, mask_ref, o_ref,
                 qkv_ref, qp_ref, kp_ref, vp_ref, heads_ref,
                 *, bb, n, heads, dim_head):
    """One grid step processes `bb` batches of `n` tokens each (rows flattened)."""
    inner = heads * dim_head

    x = x_ref[...]               # (bb*n, D)           bf16
    w_qkv = wqkv_ref[...]        # (D, 3*inner)        bf16 (scale folded into Q cols)
    w_o = wo_ref[...]            # (inner, D)          bf16
    b_o = bo_ref[...]            # (1, D)              f32
    mask = mask_ref[...]         # (bb*H*n, bb*H*n)    f32: 0 on-block, -1e30 off-block

    # Fused lane-dense QKV projection; cast ONCE to bf16 (only the MXU reads it).
    qkv_ref[...] = jnp.dot(x, w_qkv,
                           preferred_element_type=jnp.float32).astype(jnp.bfloat16)

    # Pack per-(batch, head) blocks along rows: (bb*n, 3*inner) -> 3 x (bb*H*n, Dh).
    for b in range(bb):
        for h in range(heads):
            src = b * n
            dst = (b * heads + h) * n
            qp_ref[dst:dst + n, :] = qkv_ref[src:src + n,
                                             h * dim_head:(h + 1) * dim_head]
            kp_ref[dst:dst + n, :] = qkv_ref[src:src + n,
                                             inner + h * dim_head:inner + (h + 1) * dim_head]
            vp_ref[dst:dst + n, :] = qkv_ref[src:src + n,
                                             2 * inner + h * dim_head:2 * inner + (h + 1) * dim_head]

    # All (batch, head) pairs in ONE block-diagonal score matmul + ONE softmax + ONE AV matmul.
    s = jnp.einsum('id,jd->ij', qp_ref[...], kp_ref[...],
                   preferred_element_type=jnp.float32) + mask        # (bb*H*n, bb*H*n) f32
    s = s - jnp.max(s, axis=-1, keepdims=True)
    p = jnp.exp(s)
    attn = (p * pl.reciprocal(jnp.sum(p, axis=-1, keepdims=True), approx=True)
            ).astype(jnp.bfloat16)
    out_pack = jnp.dot(attn, vp_ref[...],
                       preferred_element_type=jnp.float32)           # (bb*H*n, Dh) f32

    # Un-pack heads back to (bb*n, inner) bf16 for the single fused output projection.
    for b in range(bb):
        for h in range(heads):
            src = (b * heads + h) * n
            dst = b * n
            heads_ref[dst:dst + n, h * dim_head:(h + 1) * dim_head] = \
                out_pack[src:src + n, :].astype(jnp.bfloat16)

    res = jnp.dot(heads_ref[...], w_o, preferred_element_type=jnp.float32) + b_o
    o_ref[...] = res.astype(o_ref.dtype)


def _batches_per_step(batch):
    """Collapse the batch grid on single-TensorCore chips (v5e/v6e); keep a
    parallel batch axis on v7x (2 TCs/chip) so both cores get work."""
    try:
        kind = jax.devices()[0].device_kind.lower()
    except Exception:
        return 1
    if "v7" in kind or "tpu7" in kind:
        return 1          # keep grid=(B,) "parallel" -> one batch per TensorCore
    return batch          # single TC: one grid step for the whole batch


def attention_forward(x, w_qkv, w_out, b_out, *, heads, dim_head, scale):
    """x: (B, N, D).  w_qkv: PyTorch to_qkv weight (3*inner, D).
       w_out: PyTorch to_out weight (D, inner).  b_out: (D,)."""
    B, N, D = x.shape
    inner = heads * dim_head
    bb = _batches_per_step(B)          # batches per grid step
    m = bb * heads * N                 # packed row count per step

    # Plain-JAX layout glue (one-time): fold scale into Q in f32, transpose, cast to bf16.
    w_qkv_f = jnp.asarray(w_qkv, jnp.float32)                   # (3*inner, D)
    w_qkv_f = w_qkv_f.at[:inner, :].multiply(scale)             # scale Q rows (f32, exact for pow2)
    w_qkv_f = w_qkv_f.T.astype(jnp.bfloat16)                    # (D, 3*inner)
    w_out_f = jnp.asarray(w_out, jnp.float32).T.astype(jnp.bfloat16)   # (inner, D)
    b_out_f = jnp.asarray(b_out, jnp.float32).reshape(1, D)
    x2 = x.reshape(B * N, D).astype(jnp.bfloat16)               # rows flattened, lane-dense-ish

    # Block-diagonal softmax mask over (batch, head) blocks of size N (VMEM-resident).
    blk = np.arange(m) // N
    mask = jnp.asarray(np.where(blk[:, None] == blk[None, :], 0.0, -1e30),
                       dtype=jnp.float32)

    kernel = functools.partial(_attn_kernel, bb=bb, n=N, heads=heads,
                               dim_head=dim_head)

    out2 = pl.pallas_call(
        kernel,
        out_shape=jax.ShapeDtypeStruct((B * N, D), jnp.float32),
        grid_spec=pltpu.PrefetchScalarGridSpec(
            num_scalar_prefetch=0,
            grid=(B // bb,),
            in_specs=[
                pl.BlockSpec((bb * N, D), lambda i: (i, 0)),           # x rows for this step
                pl.BlockSpec((D, 3 * inner), lambda i: (0, 0)),        # fused W_qkv (resident)
                pl.BlockSpec((inner, D), lambda i: (0, 0)),            # W_out (resident)
                pl.BlockSpec((1, D), lambda i: (0, 0)),                # b_out (resident)
                pl.BlockSpec((m, m), lambda i: (0, 0)),                # block-diag mask (resident)
            ],
            out_specs=pl.BlockSpec((bb * N, D), lambda i: (i, 0)),
            scratch_shapes=[
                pltpu.VMEM((bb * N, 3 * inner), jnp.bfloat16),   # fused QKV projection (bf16)
                pltpu.VMEM((m, dim_head), jnp.bfloat16),         # packed Q
                pltpu.VMEM((m, dim_head), jnp.bfloat16),         # packed K
                pltpu.VMEM((m, dim_head), jnp.bfloat16),         # packed V
                pltpu.VMEM((bb * N, inner), jnp.bfloat16),       # assembled head outputs
            ],
        ),
        compiler_params=pltpu.CompilerParams(
            dimension_semantics=("parallel",)),
    )(x2, w_qkv_f, w_out_f, b_out_f, mask)

    return out2.reshape(B, N, D)


def reference_attention(x, w_qkv, w_out, b_out, heads, dim_head, scale):
    # Pure-JAX f32 reference mirroring the PyTorch module (dropout=0 -> identity).
    B, N, D = x.shape
    inner = heads * dim_head
    qkv = x @ w_qkv.T                                   # (B, N, 3*inner)
    q, k, v = jnp.split(qkv, 3, axis=-1)

    def to_heads(t):
        return t.reshape(B, N, heads, dim_head).transpose(0, 2, 1, 3)

    q, k, v = map(to_heads, (q, k, v))                  # (B, H, N, Dh)
    dots = jnp.einsum('bhid,bhjd->bhij', q, k) * scale
    attn = jax.nn.softmax(dots, axis=-1)
    out = jnp.einsum('bhij,bhjd->bhid', attn, v)
    out = out.transpose(0, 2, 1, 3).reshape(B, N, inner)
    return out @ w_out.T + b_out


if __name__ == "__main__":
    # Small shapes consistent with the module's forward.
    B, N, D = 2, 8, 32
    heads, dim_head = 4, 16
    inner = heads * dim_head
    scale = dim_head ** -0.5

    key = jax.random.PRNGKey(0)
    kx, kqkv, kwo, kbo = jax.random.split(key, 4)

    x = jax.random.normal(kx, (B, N, D), dtype=jnp.float32)
    # PyTorch Linear weights: (out_features, in_features).
    w_qkv = jax.random.normal(kqkv, (3 * inner, D), dtype=jnp.float32) * 0.05
    w_out = jax.random.normal(kwo, (D, inner), dtype=jnp.float32) * 0.05
    b_out = jax.random.normal(kbo, (D,), dtype=jnp.float32) * 0.05
    # dropout=0.0 -> Dropout is identity in this forward.

    out = attention_forward(x, w_qkv, w_out, b_out,
                            heads=heads, dim_head=dim_head, scale=scale)
    out = jax.block_until_ready(out)

    ref = reference_attention(x, w_qkv, w_out, b_out, heads, dim_head, scale)
    # bf16 MXU feeds + approx reciprocal -> relaxed tolerance vs the f32 reference.
    np.testing.assert_allclose(np.asarray(out), np.asarray(ref), rtol=2e-2, atol=2e-2)

    print("KERNEL_OK")
</pallas_src>

<mosaic_0001>
module attributes {stable_mosaic.version = 11 : i64} {
  func.func @_attn_kernel(%arg0: i32, %arg1: memref<16x32xbf16, #tpu.memory_space<vmem>>, %arg2: memref<32x192xbf16, #tpu.memory_space<vmem>>, %arg3: memref<64x32xbf16, #tpu.memory_space<vmem>>, %arg4: memref<1x32xf32, #tpu.memory_space<vmem>>, %arg5: memref<64x64xf32, #tpu.memory_space<vmem>>, %arg6: memref<16x32xf32, #tpu.memory_space<vmem>>, %arg7: memref<16x192xbf16, #tpu.memory_space<vmem>>, %arg8: memref<64x16xbf16, #tpu.memory_space<vmem>>, %arg9: memref<64x16xbf16, #tpu.memory_space<vmem>>, %arg10: memref<64x16xbf16, #tpu.memory_space<vmem>>, %arg11: memref<16x64xbf16, #tpu.memory_space<vmem>>) attributes {dimension_semantics = [#tpu.dimension_semantics<parallel>], iteration_bounds = array<i64: 1>, scalar_prefetch = 0 : i64, scratch_operands = 5 : i64, tpu.core_type = #tpu.core_type<tc>, window_params = [{transform_indices = @transform_0, window_bounds = array<i64: 16, 32>}, {pipeline_mode = #tpu.pipeline_mode<synchronous>, transform_indices = @transform_1, window_bounds = array<i64: 32, 192>}, {pipeline_mode = #tpu.pipeline_mode<synchronous>, transform_indices = @transform_2, window_bounds = array<i64: 64, 32>}, {pipeline_mode = #tpu.pipeline_mode<synchronous>, transform_indices = @transform_3, window_bounds = array<i64: 1, 32>}, {pipeline_mode = #tpu.pipeline_mode<synchronous>, transform_indices = @transform_4, window_bounds = array<i64: 64, 64>}, {transform_indices = @transform_5, window_bounds = array<i64: 16, 32>}]} {
    %c0 = arith.constant 0 : index
    %c0_0 = arith.constant 0 : index
    %0 = vector.load %arg1[%c0, %c0_0] : memref<16x32xbf16, #tpu.memory_space<vmem>>, vector<16x32xbf16>
    %c0_1 = arith.constant 0 : index
    %c0_2 = arith.constant 0 : index
    %1 = vector.load %arg2[%c0_1, %c0_2] : memref<32x192xbf16, #tpu.memory_space<vmem>>, vector<32x192xbf16>
    %c0_3 = arith.constant 0 : index
    %c0_4 = arith.constant 0 : index
    %2 = vector.load %arg3[%c0_3, %c0_4] : memref<64x32xbf16, #tpu.memory_space<vmem>>, vector<64x32xbf16>
    %c0_5 = arith.constant 0 : index
    %c0_6 = arith.constant 0 : index
    %3 = vector.load %arg4[%c0_5, %c0_6] : memref<1x32xf32, #tpu.memory_space<vmem>>, vector<1x32xf32>
    %c0_7 = arith.constant 0 : index
    %c0_8 = arith.constant 0 : index
    %4 = vector.load %arg5[%c0_7, %c0_8] : memref<64x64xf32, #tpu.memory_space<vmem>>, vector<64x64xf32>
    %cst = arith.constant dense<0.000000e+00> : vector<16x192xf32>
    %5 = tpu.matmul %0, %1, %cst {dimension_numbers = #tpu.dot_dimension_numbers<[1], [0], [0], [1], [0, 0, 1, 1], [], []>} : vector<16x32xbf16>, vector<32x192xbf16>, vector<16x192xf32> -> vector<16x192xf32>
    %6 = arith.truncf %5 : vector<16x192xf32> to vector<16x192xbf16>
    %c0_9 = arith.constant 0 : index
    %c0_10 = arith.constant 0 : index
    %7 = vector.load %arg7[%c0_9, %c0_10] : memref<16x192xbf16, #tpu.memory_space<vmem>>, vector<16x192xbf16>
    tpu.vector_store %arg7[%c0_9, %c0_10], %6 {strides = array<i32>} : memref<16x192xbf16, #tpu.memory_space<vmem>>, vector<16x192xbf16>,
    %c0_11 = arith.constant 0 : index
    %c0_12 = arith.constant 0 : index
    %8 = vector.load %arg7[%c0_11, %c0_12] : memref<16x192xbf16, #tpu.memory_space<vmem>>, vector<8x16xbf16>
    %c0_13 = arith.constant 0 : index
    %c0_14 = arith.constant 0 : index
    %9 = vector.load %arg8[%c0_13, %c0_14] : memref<64x16xbf16, #tpu.memory_space<vmem>>, vector<8x16xbf16>
    tpu.vector_store %arg8[%c0_13, %c0_14], %8 {strides = array<i32>} : memref<64x16xbf16, #tpu.memory_space<vmem>>, vector<8x16xbf16>,
    %c0_15 = arith.constant 0 : index
    %c64 = arith.constant 64 : index
    %10 = vector.load %arg7[%c0_15, %c64] : memref<16x192xbf16, #tpu.memory_space<vmem>>, vector<8x16xbf16>
    %c0_16 = arith.constant 0 : index
    %c0_17 = arith.constant 0 : index
    %11 = vector.load %arg9[%c0_16, %c0_17] : memref<64x16xbf16, #tpu.memory_space<vmem>>, vector<8x16xbf16>
    tpu.vector_store %arg9[%c0_16, %c0_17], %10 {strides = array<i32>} : memref<64x16xbf16, #tpu.memory_space<vmem>>, vector<8x16xbf16>,
    %c0_18 = arith.constant 0 : index
    %c128 = arith.constant 128 : index
    %12 = vector.load %arg7[%c0_18, %c128] : memref<16x192xbf16, #tpu.memory_space<vmem>>, vector<8x16xbf16>
    %c0_19 = arith.constant 0 : index
    %c0_20 = arith.constant 0 : index
    %13 = vector.load %arg10[%c0_19, %c0_20] : memref<64x16xbf16, #tpu.memory_space<vmem>>, vector<8x16xbf16>
    tpu.vector_store %arg10[%c0_19, %c0_20], %12 {strides = array<i32>} : memref<64x16xbf16, #tpu.memory_space<vmem>>, vector<8x16xbf16>,
    %c0_21 = arith.constant 0 : index
    %c16 = arith.constant 16 : index
    %14 = vector.load %arg7[%c0_21, %c16] : memref<16x192xbf16, #tpu.memory_space<vmem>>, vector<8x16xbf16>
    %c8 = arith.constant 8 : index
    %c0_22 = arith.constant 0 : index
    %15 = vector.load %arg8[%c8, %c0_22] : memref<64x16xbf16, #tpu.memory_space<vmem>>, vector<8x16xbf16>
    tpu.vector_store %arg8[%c8, %c0_22], %14 {strides = array<i32>} : memref<64x16xbf16, #tpu.memory_space<vmem>>, vector<8x16xbf16>,
    %c0_23 = arith.constant 0 : index
    %c80 = arith.constant 80 : index
    %16 = vector.load %arg7[%c0_23, %c80] : memref<16x192xbf16, #tpu.memory_space<vmem>>, vector<8x16xbf16>
    %c8_24 = arith.constant 8 : index
    %c0_25 = arith.constant 0 : index
    %17 = vector.load %arg9[%c8_24, %c0_25] : memref<64x16xbf16, #tpu.memory_space<vmem>>, vector<8x16xbf16>
    tpu.vector_store %arg9[%c8_24, %c0_25], %16 {strides = array<i32>} : memref<64x16xbf16, #tpu.memory_space<vmem>>, vector<8x16xbf16>,
    %c0_26 = arith.constant 0 : index
    %c144 = arith.constant 144 : index
    %18 = vector.load %arg7[%c0_26, %c144] : memref<16x192xbf16, #tpu.memory_space<vmem>>, vector<8x16xbf16>
    %c8_27 = arith.constant 8 : index
    %c0_28 = arith.constant 0 : index
    %19 = vector.load %arg10[%c8_27, %c0_28] : memref<64x16xbf16, #tpu.memory_space<vmem>>, vector<8x16xbf16>
    tpu.vector_store %arg10[%c8_27, %c0_28], %18 {strides = array<i32>} : memref<64x16xbf16, #tpu.memory_space<vmem>>, vector<8x16xbf16>,
    %c0_29 = arith.constant 0 : index
    %c32 = arith.constant 32 : index
    %20 = vector.load %arg7[%c0_29, %c32] : memref<16x192xbf16, #tpu.memory_space<vmem>>, vector<8x16xbf16>
    %c16_30 = arith.constant 16 : index
    %c0_31 = arith.constant 0 : index
    %21 = vector.load %arg8[%c16_30, %c0_31] : memref<64x16xbf16, #tpu.memory_space<vmem>>, vector<8x16xbf16>
    tpu.vector_store %arg8[%c16_30, %c0_31], %20 {strides = array<i32>} : memref<64x16xbf16, #tpu.memory_space<vmem>>, vector<8x16xbf16>,
    %c0_32 = arith.constant 0 : index
    %c96 = arith.constant 96 : index
    %22 = vector.load %arg7[%c0_32, %c96] : memref<16x192xbf16, #tpu.memory_space<vmem>>, vector<8x16xbf16>
    %c16_33 = arith.constant 16 : index
    %c0_34 = arith.constant 0 : index
    %23 = vector.load %arg9[%c16_33, %c0_34] : memref<64x16xbf16, #tpu.memory_space<vmem>>, vector<8x16xbf16>
    tpu.vector_store %arg9[%c16_33, %c0_34], %22 {strides = array<i32>} : memref<64x16xbf16, #tpu.memory_space<vmem>>, vector<8x16xbf16>,
    %c0_35 = arith.constant 0 : index
    %c160 = arith.constant 160 : index
    %24 = vector.load %arg7[%c0_35, %c160] : memref<16x192xbf16, #tpu.memory_space<vmem>>, vector<8x16xbf16>
    %c16_36 = arith.constant 16 : index
    %c0_37 = arith.constant 0 : index
    %25 = vector.load %arg10[%c16_36, %c0_37] : memref<64x16xbf16, #tpu.memory_space<vmem>>, vector<8x16xbf16>
    tpu.vector_store %arg10[%c16_36, %c0_37], %24 {strides = array<i32>} : memref<64x16xbf16, #tpu.memory_space<vmem>>, vector<8x16xbf16>,
    %c0_38 = arith.constant 0 : index
    %c48 = arith.constant 48 : index
    %26 = vector.load %arg7[%c0_38, %c48] : memref<16x192xbf16, #tpu.memory_space<vmem>>, vector<8x16xbf16>
    %c24 = arith.constant 24 : index
    %c0_39 = arith.constant 0 : index
    %27 = vector.load %arg8[%c24, %c0_39] : memref<64x16xbf16, #tpu.memory_space<vmem>>, vector<8x16xbf16>
    tpu.vector_store %arg8[%c24, %c0_39], %26 {strides = array<i32>} : memref<64x16xbf16, #tpu.memory_space<vmem>>, vector<8x16xbf16>,
    %c0_40 = arith.constant 0 : index
    %c112 = arith.constant 112 : index
    %28 = vector.load %arg7[%c0_40, %c112] : memref<16x192xbf16, #tpu.memory_space<vmem>>, vector<8x16xbf16>
    %c24_41 = arith.constant 24 : index
    %c0_42 = arith.constant 0 : index
    %29 = vector.load %arg9[%c24_41, %c0_42] : memref<64x16xbf16, #tpu.memory_space<vmem>>, vector<8x16xbf16>
    tpu.vector_store %arg9[%c24_41, %c0_42], %28 {strides = array<i32>} : memref<64x16xbf16, #tpu.memory_space<vmem>>, vector<8x16xbf16>,
    %c0_43 = arith.constant 0 : index
    %c176 = arith.constant 176 : index
    %30 = vector.load %arg7[%c0_43, %c176] : memref<16x192xbf16, #tpu.memory_space<vmem>>, vector<8x16xbf16>
    %c24_44 = arith.constant 24 : index
    %c0_45 = arith.constant 0 : index
    %31 = vector.load %arg10[%c24_44, %c0_45] : memref<64x16xbf16, #tpu.memory_space<vmem>>, vector<8x16xbf16>
    tpu.vector_store %arg10[%c24_44, %c0_45], %30 {strides = array<i32>} : memref<64x16xbf16, #tpu.memory_space<vmem>>, vector<8x16xbf16>,
    %c8_46 = arith.constant 8 : index
    %c0_47 = arith.constant 0 : index
    %32 = vector.load %arg7[%c8_46, %c0_47] : memref<16x192xbf16, #tpu.memory_space<vmem>>, vector<8x16xbf16>
    %c32_48 = arith.constant 32 : index
    %c0_49 = arith.constant 0 : index
    %33 = vector.load %arg8[%c32_48, %c0_49] : memref<64x16xbf16, #tpu.memory_space<vmem>>, vector<8x16xbf16>
    tpu.vector_store %arg8[%c32_48, %c0_49], %32 {strides = array<i32>} : memref<64x16xbf16, #tpu.memory_space<vmem>>, vector<8x16xbf16>,
    %c8_50 = arith.constant 8 : index
    %c64_51 = arith.constant 64 : index
    %34 = vector.load %arg7[%c8_50, %c64_51] : memref<16x192xbf16, #tpu.memory_space<vmem>>, vector<8x16xbf16>
    %c32_52 = arith.constant 32 : index
    %c0_53 = arith.constant 0 : index
    %35 = vector.load %arg9[%c32_52, %c0_53] : memref<64x16xbf16, #tpu.memory_space<vmem>>, vector<8x16xbf16>
    tpu.vector_store %arg9[%c32_52, %c0_53], %34 {strides = array<i32>} : memref<64x16xbf16, #tpu.memory_space<vmem>>, vector<8x16xbf16>,
    %c8_54 = arith.constant 8 : index
    %c128_55 = arith.constant 128 : index
    %36 = vector.load %arg7[%c8_54, %c128_55] : memref<16x192xbf16, #tpu.memory_space<vmem>>, vector<8x16xbf16>
    %c32_56 = arith.constant 32 : index
    %c0_57 = arith.constant 0 : index
    %37 = vector.load %arg10[%c32_56, %c0_57] : memref<64x16xbf16, #tpu.memory_space<vmem>>, vector<8x16xbf16>
    tpu.vector_store %arg10[%c32_56, %c0_57], %36 {strides = array<i32>} : memref<64x16xbf16, #tpu.memory_space<vmem>>, vector<8x16xbf16>,
    %c8_58 = arith.constant 8 : index
    %c16_59 = arith.constant 16 : index
    %38 = vector.load %arg7[%c8_58, %c16_59] : memref<16x192xbf16, #tpu.memory_space<vmem>>, vector<8x16xbf16>
    %c40 = arith.constant 40 : index
    %c0_60 = arith.constant 0 : index
    %39 = vector.load %arg8[%c40, %c0_60] : memref<64x16xbf16, #tpu.memory_space<vmem>>, vector<8x16xbf16>
    tpu.vector_store %arg8[%c40, %c0_60], %38 {strides = array<i32>} : memref<64x16xbf16, #tpu.memory_space<vmem>>, vector<8x16xbf16>,
    %c8_61 = arith.constant 8 : index
    %c80_62 = arith.constant 80 : index
    %40 = vector.load %arg7[%c8_61, %c80_62] : memref<16x192xbf16, #tpu.memory_space<vmem>>, vector<8x16xbf16>
    %c40_63 = arith.constant 40 : index
    %c0_64 = arith.constant 0 : index
    %41 = vector.load %arg9[%c40_63, %c0_64] : memref<64x16xbf16, #tpu.memory_space<vmem>>, vector<8x16xbf16>
    tpu.vector_store %arg9[%c40_63, %c0_64], %40 {strides = array<i32>} : memref<64x16xbf16, #tpu.memory_space<vmem>>, vector<8x16xbf16>,
    %c8_65 = arith.constant 8 : index
    %c144_66 = arith.constant 144 : index
    %42 = vector.load %arg7[%c8_65, %c144_66] : memref<16x192xbf16, #tpu.memory_space<vmem>>, vector<8x16xbf16>
    %c40_67 = arith.constant 40 : index
    %c0_68 = arith.constant 0 : index
    %43 = vector.load %arg10[%c40_67, %c0_68] : memref<64x16xbf16, #tpu.memory_space<vmem>>, vector<8x16xbf16>
    tpu.vector_store %arg10[%c40_67, %c0_68], %42 {strides = array<i32>} : memref<64x16xbf16, #tpu.memory_space<vmem>>, vector<8x16xbf16>,
    %c8_69 = arith.constant 8 : index
    %c32_70 = arith.constant 32 : index
    %44 = vector.load %arg7[%c8_69, %c32_70] : memref<16x192xbf16, #tpu.memory_space<vmem>>, vector<8x16xbf16>
    %c48_71 = arith.constant 48 : index
    %c0_72 = arith.constant 0 : index
    %45 = vector.load %arg8[%c48_71, %c0_72] : memref<64x16xbf16, #tpu.memory_space<vmem>>, vector<8x16xbf16>
    tpu.vector_store %arg8[%c48_71, %c0_72], %44 {strides = array<i32>} : memref<64x16xbf16, #tpu.memory_space<vmem>>, vector<8x16xbf16>,
    %c8_73 = arith.constant 8 : index
    %c96_74 = arith.constant 96 : index
    %46 = vector.load %arg7[%c8_73, %c96_74] : memref<16x192xbf16, #tpu.memory_space<vmem>>, vector<8x16xbf16>
    %c48_75 = arith.constant 48 : index
    %c0_76 = arith.constant 0 : index
    %47 = vector.load %arg9[%c48_75, %c0_76] : memref<64x16xbf16, #tpu.memory_space<vmem>>, vector<8x16xbf16>
    tpu.vector_store %arg9[%c48_75, %c0_76], %46 {strides = array<i32>} : memref<64x16xbf16, #tpu.memory_space<vmem>>, vector<8x16xbf16>,
    %c8_77 = arith.constant 8 : index
    %c160_78 = arith.constant 160 : index
    %48 = vector.load %arg7[%c8_77, %c160_78] : memref<16x192xbf16, #tpu.memory_space<vmem>>, vector<8x16xbf16>
    %c48_79 = arith.constant 48 : index
    %c0_80 = arith.constant 0 : index
    %49 = vector.load %arg10[%c48_79, %c0_80] : memref<64x16xbf16, #tpu.memory_space<vmem>>, vector<8x16xbf16>
    tpu.vector_store %arg10[%c48_79, %c0_80], %48 {strides = array<i32>} : memref<64x16xbf16, #tpu.memory_space<vmem>>, vector<8x16xbf16>,
    %c8_81 = arith.constant 8 : index
    %c48_82 = arith.constant 48 : index
    %50 = vector.load %arg7[%c8_81, %c48_82] : memref<16x192xbf16, #tpu.memory_space<vmem>>, vector<8x16xbf16>
    %c56 = arith.constant 56 : index
    %c0_83 = arith.constant 0 : index
    %51 = vector.load %arg8[%c56, %c0_83] : memref<64x16xbf16, #tpu.memory_space<vmem>>, vector<8x16xbf16>
    tpu.vector_store %arg8[%c56, %c0_83], %50 {strides = array<i32>} : memref<64x16xbf16, #tpu.memory_space<vmem>>, vector<8x16xbf16>,
    %c8_84 = arith.constant 8 : index
    %c112_85 = arith.constant 112 : index
    %52 = vector.load %arg7[%c8_84, %c112_85] : memref<16x192xbf16, #tpu.memory_space<vmem>>, vector<8x16xbf16>
    %c56_86 = arith.constant 56 : index
    %c0_87 = arith.constant 0 : index
    %53 = vector.load %arg9[%c56_86, %c0_87] : memref<64x16xbf16, #tpu.memory_space<vmem>>, vector<8x16xbf16>
    tpu.vector_store %arg9[%c56_86, %c0_87], %52 {strides = array<i32>} : memref<64x16xbf16, #tpu.memory_space<vmem>>, vector<8x16xbf16>,
    %c8_88 = arith.constant 8 : index
    %c176_89 = arith.constant 176 : index
    %54 = vector.load %arg7[%c8_88, %c176_89] : memref<16x192xbf16, #tpu.memory_space<vmem>>, vector<8x16xbf16>
    %c56_90 = arith.constant 56 : index
    %c0_91 = arith.constant 0 : index
    %55 = vector.load %arg10[%c56_90, %c0_91] : memref<64x16xbf16, #tpu.memory_space<vmem>>, vector<8x16xbf16>
    tpu.vector_store %arg10[%c56_90, %c0_91], %54 {strides = array<i32>} : memref<64x16xbf16, #tpu.memory_space<vmem>>, vector<8x16xbf16>,
    %c0_92 = arith.constant 0 : index
    %c0_93 = arith.constant 0 : index
    %56 = vector.load %arg8[%c0_92, %c0_93] : memref<64x16xbf16, #tpu.memory_space<vmem>>, vector<64x16xbf16>
    %c0_94 = arith.constant 0 : index
    %c0_95 = arith.constant 0 : index
    %57 = vector.load %arg9[%c0_94, %c0_95] : memref<64x16xbf16, #tpu.memory_space<vmem>>, vector<64x16xbf16>
    "tpu.trace_start"() <{level = 10 : i32, message = "id,jd->ij"}> : () -> ()
    %cst_96 = arith.constant dense<0.000000e+00> : vector<64x64xf32>
    %58 = tpu.matmul %56, %57, %cst_96 {dimension_numbers = #tpu.dot_dimension_numbers<[1], [1], [0], [0], [0, 0, 1, 0], [], []>} : vector<64x16xbf16>, vector<64x16xbf16>, vector<64x64xf32> -> vector<64x64xf32>
    "tpu.trace_stop"() : () -> ()
    %59 = arith.addf %58, %4 : vector<64x64xf32>
    %cst_97 = arith.constant dense<0xFF800000> : vector<64xf32>
    %60 = vector.multi_reduction <maximumf>, %59, %cst_97 [1] : vector<64x64xf32> to vector<64xf32>
    %61 = vector.shape_cast %60 : vector<64xf32> to vector<64x1xf32>
    %62 = vector.broadcast %61 : vector<64x1xf32> to vector<64x64xf32>
    %63 = arith.subf %59, %62 : vector<64x64xf32>
    %64 = math.exp %63 : vector<64x64xf32>
    %cst_98 = arith.constant dense<0.000000e+00> : vector<64xf32>
    %65 = vector.multi_reduction <add>, %64, %cst_98 [1] : vector<64x64xf32> to vector<64xf32>
    %66 = vector.shape_cast %65 : vector<64xf32> to vector<64x1xf32>
    %67 = tpu.reciprocal %66 {approx = true} : vector<64x1xf32> -> vector<64x1xf32>
    %68 = vector.broadcast %67 : vector<64x1xf32> to vector<64x64xf32>
    %69 = arith.mulf %64, %68 : vector<64x64xf32>
    %70 = arith.truncf %69 : vector<64x64xf32> to vector<64x64xbf16>
    %c0_99 = arith.constant 0 : index
    %c0_100 = arith.constant 0 : index
    %71 = vector.load %arg10[%c0_99, %c0_100] : memref<64x16xbf16, #tpu.memory_space<vmem>>, vector<64x16xbf16>
    %cst_101 = arith.constant dense<0.000000e+00> : vector<64x16xf32>
    %72 = tpu.matmul %70, %71, %cst_101 {dimension_numbers = #tpu.dot_dimension_numbers<[1], [0], [0], [1], [0, 0, 1, 1], [], []>} : vector<64x64xbf16>, vector<64x16xbf16>, vector<64x16xf32> -> vector<64x16xf32>
    %73 = vector.extract_strided_slice %72 {offsets = [0, 0], sizes = [8, 16], strides = [1, 1]} : vector<64x16xf32> to vector<8x16xf32>
    %74 = arith.truncf %73 : vector<8x16xf32> to vector<8x16xbf16>
    %c0_102 = arith.constant 0 : index
    %c0_103 = arith.constant 0 : index
    %75 = vector.load %arg11[%c0_102, %c0_103] : memref<16x64xbf16, #tpu.memory_space<vmem>>, vector<8x16xbf16>
    tpu.vector_store %arg11[%c0_102, %c0_103], %74 {strides = array<i32>} : memref<16x64xbf16, #tpu.memory_space<vmem>>, vector<8x16xbf16>,
    %76 = vector.extract_strided_slice %72 {offsets = [8, 0], sizes = [8, 16], strides = [1, 1]} : vector<64x16xf32> to vector<8x16xf32>
    %77 = arith.truncf %76 : vector<8x16xf32> to vector<8x16xbf16>
    %c0_104 = arith.constant 0 : index
    %c16_105 = arith.constant 16 : index
    %78 = vector.load %arg11[%c0_104, %c16_105] : memref<16x64xbf16, #tpu.memory_space<vmem>>, vector<8x16xbf16>
    tpu.vector_store %arg11[%c0_104, %c16_105], %77 {strides = array<i32>} : memref<16x64xbf16, #tpu.memory_space<vmem>>, vector<8x16xbf16>,
    %79 = vector.extract_strided_slice %72 {offsets = [16, 0], sizes = [8, 16], strides = [1, 1]} : vector<64x16xf32> to vector<8x16xf32>
    %80 = arith.truncf %79 : vector<8x16xf32> to vector<8x16xbf16>
    %c0_106 = arith.constant 0 : index
    %c32_107 = arith.constant 32 : index
    %81 = vector.load %arg11[%c0_106, %c32_107] : memref<16x64xbf16, #tpu.memory_space<vmem>>, vector<8x16xbf16>
    tpu.vector_store %arg11[%c0_106, %c32_107], %80 {strides = array<i32>} : memref<16x64xbf16, #tpu.memory_space<vmem>>, vector<8x16xbf16>,
    %82 = vector.extract_strided_slice %72 {offsets = [24, 0], sizes = [8, 16], strides = [1, 1]} : vector<64x16xf32> to vector<8x16xf32>
    %83 = arith.truncf %82 : vector<8x16xf32> to vector<8x16xbf16>
    %c0_108 = arith.constant 0 : index
    %c48_109 = arith.constant 48 : index
    %84 = vector.load %arg11[%c0_108, %c48_109] : memref<16x64xbf16, #tpu.memory_space<vmem>>, vector<8x16xbf16>
    tpu.vector_store %arg11[%c0_108, %c48_109], %83 {strides = array<i32>} : memref<16x64xbf16, #tpu.memory_space<vmem>>, vector<8x16xbf16>,
    %85 = vector.extract_strided_slice %72 {offsets = [32, 0], sizes = [8, 16], strides = [1, 1]} : vector<64x16xf32> to vector<8x16xf32>
    %86 = arith.truncf %85 : vector<8x16xf32> to vector<8x16xbf16>
    %c8_110 = arith.constant 8 : index
    %c0_111 = arith.constant 0 : index
    %87 = vector.load %arg11[%c8_110, %c0_111] : memref<16x64xbf16, #tpu.memory_space<vmem>>, vector<8x16xbf16>
    tpu.vector_store %arg11[%c8_110, %c0_111], %86 {strides = array<i32>} : memref<16x64xbf16, #tpu.memory_space<vmem>>, vector<8x16xbf16>,
    %88 = vector.extract_strided_slice %72 {offsets = [40, 0], sizes = [8, 16], strides = [1, 1]} : vector<64x16xf32> to vector<8x16xf32>
    %89 = arith.truncf %88 : vector<8x16xf32> to vector<8x16xbf16>
    %c8_112 = arith.constant 8 : index
    %c16_113 = arith.constant 16 : index
    %90 = vector.load %arg11[%c8_112, %c16_113] : memref<16x64xbf16, #tpu.memory_space<vmem>>, vector<8x16xbf16>
    tpu.vector_store %arg11[%c8_112, %c16_113], %89 {strides = array<i32>} : memref<16x64xbf16, #tpu.memory_space<vmem>>, vector<8x16xbf16>,
    %91 = vector.extract_strided_slice %72 {offsets = [48, 0], sizes = [8, 16], strides = [1, 1]} : vector<64x16xf32> to vector<8x16xf32>
    %92 = arith.truncf %91 : vector<8x16xf32> to vector<8x16xbf16>
    %c8_114 = arith.constant 8 : index
    %c32_115 = arith.constant 32 : index
    %93 = vector.load %arg11[%c8_114, %c32_115] : memref<16x64xbf16, #tpu.memory_space<vmem>>, vector<8x16xbf16>
    tpu.vector_store %arg11[%c8_114, %c32_115], %92 {strides = array<i32>} : memref<16x64xbf16, #tpu.memory_space<vmem>>, vector<8x16xbf16>,
    %94 = vector.extract_strided_slice %72 {offsets = [56, 0], sizes = [8, 16], strides = [1, 1]} : vector<64x16xf32> to vector<8x16xf32>
    %95 = arith.truncf %94 : vector<8x16xf32> to vector<8x16xbf16>
    %c8_116 = arith.constant 8 : index
    %c48_117 = arith.constant 48 : index
    %96 = vector.load %arg11[%c8_116, %c48_117] : memref<16x64xbf16, #tpu.memory_space<vmem>>, vector<8x16xbf16>
    tpu.vector_store %arg11[%c8_116, %c48_117], %95 {strides = array<i32>} : memref<16x64xbf16, #tpu.memory_space<vmem>>, vector<8x16xbf16>,
    %c0_118 = arith.constant 0 : index
    %c0_119 = arith.constant 0 : index
    %97 = vector.load %arg11[%c0_118, %c0_119] : memref<16x64xbf16, #tpu.memory_space<vmem>>, vector<16x64xbf16>
    %cst_120 = arith.constant dense<0.000000e+00> : vector<16x32xf32>
    %98 = tpu.matmul %97, %2, %cst_120 {dimension_numbers = #tpu.dot_dimension_numbers<[1], [0], [0], [1], [0, 0, 1, 1], [], []>} : vector<16x64xbf16>, vector<64x32xbf16>, vector<16x32xf32> -> vector<16x32xf32>
    %99 = vector.broadcast %3 : vector<1x32xf32> to vector<16x32xf32>
    %100 = arith.addf %98, %99 : vector<16x32xf32>
    %c0_121 = arith.constant 0 : index
    %c0_122 = arith.constant 0 : index
    %101 = vector.load %arg6[%c0_121, %c0_122] : memref<16x32xf32, #tpu.memory_space<vmem>>, vector<16x32xf32>
    tpu.vector_store %arg6[%c0_121, %c0_122], %100 {strides = array<i32>} : memref<16x32xf32, #tpu.memory_space<vmem>>, vector<16x32xf32>,
    return
  }
  func.func @transform_0(%arg0: i32) -> (i32, i32) {
    %c0_i32 = arith.constant 0 : i32
    %c0_i32_0 = arith.constant 0 : i32
    return %arg0, %c0_i32 : i32, i32
  }
  func.func @transform_1(%arg0: i32) -> (i32, i32) {
    %c0_i32 = arith.constant 0 : i32
    %c0_i32_0 = arith.constant 0 : i32
    %c0_i32_1 = arith.constant 0 : i32
    return %c0_i32, %c0_i32_0 : i32, i32
  }
  func.func @transform_2(%arg0: i32) -> (i32, i32) {
    %c0_i32 = arith.constant 0 : i32
    %c0_i32_0 = arith.constant 0 : i32
    %c0_i32_1 = arith.constant 0 : i32
    return %c0_i32, %c0_i32_0 : i32, i32
  }
  func.func @transform_3(%arg0: i32) -> (i32, i32) {
    %c0_i32 = arith.constant 0 : i32
    %c0_i32_0 = arith.constant 0 : i32
    %c0_i32_1 = arith.constant 0 : i32
    return %c0_i32, %c0_i32_0 : i32, i32
  }
  func.func @transform_4(%arg0: i32) -> (i32, i32) {
    %c0_i32 = arith.constant 0 : i32
    %c0_i32_0 = arith.constant 0 : i32
    %c0_i32_1 = arith.constant 0 : i32
    return %c0_i32, %c0_i32_0 : i32, i32
  }
  func.func @transform_5(%arg0: i32) -> (i32, i32) {
    %c0_i32 = arith.constant 0 : i32
    %c0_i32_0 = arith.constant 0 : i32
    return %arg0, %c0_i32 : i32, i32
  }
}

</mosaic_0001>

<llo_original>
// kernel: tpu_custom_call.1
$region0: #{tpu_custom_call.1}
  #allocation0 [shape = 'u32[]', space=smem, size = 0x4, offset = 0x4, fixed_abs, tag = 'smem constant byte address 0x4 - core index']
  #allocation1 [shape = 'u32[144,128]{1,0:T(1,128)}', space=vmem, size = 0x12000, scoped, tag = 'internal scratch']
  #allocation2 [shape = 'bf16[16,192]{1,0:T(8,128)(2,1)}', space=vmem, size = 0x2000, scoped, tag = 'scratch operand']
  #allocation3 [shape = 'bf16[64,16]{1,0:T(8,128)(2,1)}', space=vmem, size = 0x4000, scoped, tag = 'scratch operand']
  #allocation4 [shape = 'bf16[64,16]{1,0:T(8,128)(2,1)}', space=vmem, size = 0x4000, scoped, tag = 'scratch operand']
  #allocation5 [shape = 'bf16[64,16]{1,0:T(8,128)(2,1)}', space=vmem, size = 0x4000, scoped, tag = 'scratch operand']
  #allocation6 [shape = 'bf16[16,64]{1,0:T(8,128)(2,1)}', space=vmem, size = 0x1000, scoped, tag = 'scratch operand']
  %s0 = inlined_call_operand.vmem [shape: bf16[16,32], index: 0, kind: input, shape index: {}]
  %s1 = inlined_call_operand.vmem [shape: bf16[32,192], index: 1, kind: input, shape index: {}]
  %s2 = inlined_call_operand.vmem [shape: bf16[64,32], index: 2, kind: input, shape index: {}]
  %s3 = inlined_call_operand.vmem [shape: f32[1,32], index: 3, kind: input, shape index: {}]
  %s4 = inlined_call_operand.hbm [shape: f32[64,64], index: 4, kind: input, shape index: {}]
  %s5 = inlined_call_operand.hbm [shape: f32[16,32], index: 5, kind: output, shape index: {}]
  %s6 = sld [smem:[#allocation0]]
  $region34: #{tpu_custom_call.1} parent=0
    _
  %s8 = ssub.s32 1, %s6
  %s9 = scalar_select 0, %s8, %s6
  $region1: #{tpu_custom_call.1} parent=0
    #allocation7 [shape = 'u8[32768]{0}', space=vmem, size = 0x8000, scoped, tag = 'input window, operand 4, single buffered']
    #allocation8 [shape = 's32[1]{0}', space=sflag, size = 0x4, scoped, tag = 'scoped memory for tpu_custom_call.1']
    #allocation9 [shape = 's32[1]{0}', space=sflag, size = 0x4, scoped, tag = 'scoped memory for tpu_custom_call.1']
    #allocation10 [shape = 'u8[8192]{0}', space=vmem, size = 0x2000, scoped, tag = 'output window, operand 0, single buffered']
    %10 = vsyncpa [#allocation8], 0
    %11 = vsyncpa [#allocation9], 0
    // Predicated region
    $region2: #{tpu_custom_call.1} parent=1 // pred_check
      _
    $region3: #{tpu_custom_call.1} parent=1 // pred_check_branch
      %13 = sbr.rel (0) target = $region5
    $region4: #{tpu_custom_call.1} parent=1 // pred_region
      _
    $region5: #{tpu_custom_call.1} parent=1 // pred_fallthru
      _
    // Predicated region
    $region6: #{tpu_custom_call.1} parent=1 // pred_check
      _
    $region7: #{tpu_custom_call.1} parent=1 // pred_check_branch
      %15 = sbr.rel (0) target = $region9
    $region8: #{tpu_custom_call.1} parent=1 // pred_region
      _
    $region9: #{tpu_custom_call.1} parent=1 // pred_fallthru
      _
    // Predicated region
    $region10: #{tpu_custom_call.1} parent=1 // pred_check
      _
    $region11: #{tpu_custom_call.1} parent=1 // pred_check_branch
      %17 = sbr.rel (0) target = $region13
    $region12: #{tpu_custom_call.1} parent=1 // pred_region
      _
    $region13: #{tpu_custom_call.1} parent=1 // pred_fallthru
      _
    // Predicated region
    $region14: #{tpu_custom_call.1} parent=1 // pred_check
      _
    $region15: #{tpu_custom_call.1} parent=1 // pred_check_branch
      %19 = sbr.rel (0) target = $region17
    $region16: #{tpu_custom_call.1} parent=1 // pred_region
      _
    $region17: #{tpu_custom_call.1} parent=1 // pred_fallthru
      _
    // Predicated region
    $region18: #{tpu_custom_call.1} parent=1 // pred_check
      _
    $region19: #{tpu_custom_call.1} parent=1 // pred_check_branch
      %21 = sbr.rel (0) target = $region21
    $region20: #{tpu_custom_call.1} parent=1 // pred_region
      %s23 = ssub.s32 1024, 1024
      %24 = vsyncadd [#allocation8], %s23
      %s25 = sshll.u32 [#allocation7], 4
      %s26 = int_to_ptr.vmem [resolvable:$true] %s25
      %31 = dma.hbm_to_vmem [thread:$0]  %s4, 1024, %s26, [#allocation8], 128, 128, 8
    $region21: #{tpu_custom_call.1} parent=1 // pred_fallthru
      _
    // Predicated region
    $region22: #{tpu_custom_call.1} parent=1 // pred_check
      _
    $region23: #{tpu_custom_call.1} parent=1 // pred_check_branch
      %33 = sbr.rel (0) target = $region25
    $region24: #{tpu_custom_call.1} parent=1 // pred_region
      %34 = dma.done [#allocation8], 1024
    $region25: #{tpu_custom_call.1} parent=1 // pred_fallthru
      _
    %v36 = vld [vmem:[%s0] sm:$0xf]
    %v37 = vld [vmem:[%s0 + $0x4] sm:$0xf]
    %v38 = vld [vmem:[%s1] sm:$0xff]
    %v39 = vld [vmem:[%s1 + $0x8] sm:$0xff]
    %v40 = vld [vmem:[%s1 + $0x10] sm:$0xff]
    %v41 = vld [vmem:[%s1 + $0x18] sm:$0xff]
    %v42 = vld [vmem:[%s2] sm:$0xf]
    %v43 = vld [vmem:[%s2 + $0x4] sm:$0xf]
    %v44 = vld [vmem:[%s2 + $0x8] sm:$0xf]
    %v45 = vld [vmem:[%s2 + $0xc] sm:$0xf]
    %v46 = vld [vmem:[%s2 + $0x10] sm:$0xf]
    %v47 = vld [vmem:[%s2 + $0x14] sm:$0xf]
    %v48 = vld [vmem:[%s2 + $0x18] sm:$0xf]
    %v49 = vld [vmem:[%s2 + $0x1c] sm:$0xf]
    %v50 = vld [vmem:[%s3] sm:$0x1]
    %v51 = vld [vmem:[#allocation7] sm:$0xff]
    %v52 = vld [vmem:[#allocation7 + $0x8] sm:$0xff]
    %v53 = vld [vmem:[#allocation7 + $0x10] sm:$0xff]
    %v54 = vld [vmem:[#allocation7 + $0x18] sm:$0xff]
    %v55 = vld [vmem:[#allocation7 + $0x20] sm:$0xff]
    %v56 = vld [vmem:[#allocation7 + $0x28] sm:$0xff]
    %v57 = vld [vmem:[#allocation7 + $0x30] sm:$0xff]
    %v58 = vld [vmem:[#allocation7 + $0x38] sm:$0xff]
    %v61 = vunpack.c.l.b16 %v36
    %v62 = vunpack.c.l.b16 %v37
    %v63 = vpack.c.b16 %v62, %v61
    %v68 = vunpack.c.l.b16 %v38
    %v69 = vunpack.c.h.b16 %v38
    %v70 = vunpack.c.l.b16 %v39
    %v71 = vunpack.c.h.b16 %v39
    %v72 = vunpack.c.l.b16 %v40
    %v73 = vunpack.c.h.b16 %v40
    %v74 = vunpack.c.l.b16 %v41
    %v75 = vunpack.c.h.b16 %v41
    %v76 = vpack.c.b16 %v70, %v68
    %v77 = vpack.c.b16 %v71, %v69
    %v78 = vpack.c.b16 %v74, %v72
    %v79 = vpack.c.b16 %v75, %v73
    %vm84 = vcmask 261120
    %v86 = vsel %vm84, %v63, 0
    %88 = vmatprep.subr.bf16.mxu0 0
    %89 = vmatpush1.bf16.msra.mxu0 0
    %90 = vmatprep.subr.bf16.mxu0 0
    %91 = vmatpush1.bf16.msra.mxu0 0
    %92 = vmatprep.subr.bf16.mxu0 0
    %93 = vmatpush1.bf16.msra.mxu0 0
    %94 = vmatprep.subr.bf16.mxu0 0
    %95 = vmatpush1.bf16.msra.mxu0 0
    %96 = vmatprep.subr.bf16.mxu0 0
    %97 = vmatpush1.bf16.msra.mxu0 0
    %98 = vmatprep.subr.bf16.mxu0 0
    %99 = vmatpush1.bf16.msra.mxu0 0
    %100 = vmatprep.subr.bf16.mxu0 %v79
    %101 = vmatpush1.bf16.msra.mxu0 %v78
    %102 = vmatprep.subr.bf16.mxu0 %v77
    %103 = vmatpush1.bf16.msra.mxu0 %v76
    %104 = vmatprep.subr.bf16.mxu0 0
    %105 = vmatpush2.bf16.msra.mxu0 0
    %106 = vmatprep.subr.bf16.mxu0 0
    %107 = vmatpush2.bf16.msra.mxu0 0
    %108 = vmatprep.subr.bf16.mxu0 0
    %109 = vmatpush2.bf16.msra.mxu0 0
    %110 = vmatprep.subr.bf16.mxu0 0
    %111 = vmatpush2.bf16.msra.mxu0 0
    %112 = vmatprep.subr.bf16.mxu0 0
    %113 = vmatpush2.bf16.msra.mxu0 0
    %114 = vmatprep.subr.bf16.mxu0 0
    %115 = vmatpush2.bf16.msra.mxu0 0
    %116 = vmatprep.subr.bf16.mxu0 0
    %117 = vmatpush2.bf16.msra.mxu0 0
    %118 = vmatprep.subr.bf16.mxu0 0
    %119 = vmatpush2.bf16.msra.mxu0 0
    %120 = vmatprep.mubr.bf16.mxu0 0
    %121 = vmatmul.mubr.bf16.gmra.mxu0 %v86
    %v122 = vpop.f32.mrf.mxu0
    %v123 = vadd.f32 0.0, %v122
    %v124 = vpop.f32.mrf.mxu0
    %v125 = vadd.f32 0.0, %v124
    %v126 = vpop.f32.mrf.mxu0
    %v127 = vadd.f32 0.0, %v126
    %v128 = vpop.f32.mrf.mxu0
    %v129 = vadd.f32 0.0, %v128
    %130 = vdwg.mxu0
    %v131 = vpack.c.bf16 %v127, %v123
    %v132 = vpack.c.bf16 %v129, %v125
    %v135 = vunpack.c.l.b16 %v131
    %v136 = vunpack.c.l.b16 %v132
    %v137 = vunpack.c.h.b16 %v131
    %v138 = vunpack.c.h.b16 %v132
    %v139 = vpack.c.b16 %v136, %v135
    %v140 = vpack.c.b16 %v138, %v137
    %vm143 = vcmask 1043456
    %vm144 = vcmask 523268
    %vm145 = vmor %vm144, %vm143
    %146 = vst.msk [vmem:[#allocation2] sm:$0xff] %vm145, %v139
    %147 = vst.msk [vmem:[#allocation2 + $0x8] sm:$0xff] %vm145, %v140
    %v148 = vld [vmem:[#allocation2] sm:$0xf]
    %vm149 = vcmask 125952
    %150 = vst.msk [vmem:[#allocation3] sm:$0xf] %vm149, %v148
    %v151 = vld [vmem:[#allocation2] sm:$0xf]
    %153 = vrot.lane.b32.xlu0 %v151, 64
    %v154 = vpop.permute.xlu0 %153
    %156 = vst.msk [vmem:[#allocation4] sm:$0xf] %vm149, %v154
    %v157 = vld [vmem:[#allocation2 + $0x4] sm:$0xf]
    %158 = vst.msk [vmem:[#allocation5] sm:$0xf] %vm149, %v157
    %v159 = vld [vmem:[#allocation2] sm:$0xf]
    %161 = vrot.lane.b32.xlu0 %v159, 112
    %v162 = vpop.permute.xlu0 %161
    %164 = vst.msk [vmem:[#allocation3 + $0x4] sm:$0xf] %vm149, %v162
    %v165 = vld [vmem:[#allocation2] sm:$0xf]
    %167 = vrot.lane.b32.xlu0 %v165, 48
    %v168 = vpop.permute.xlu0 %167
    %170 = vst.msk [vmem:[#allocation4 + $0x4] sm:$0xf] %vm149, %v168
    %v171 = vld [vmem:[#allocation2 + $0x4] sm:$0xf]
    %173 = vrot.lane.b32.xlu0 %v171, 112
    %v174 = vpop.permute.xlu0 %173
    %176 = vst.msk [vmem:[#allocation5 + $0x4] sm:$0xf] %vm149, %v174
    %v177 = vld [vmem:[#allocation2] sm:$0xf]
    %179 = vrot.lane.b32.xlu0 %v177, 96
    %v180 = vpop.permute.xlu0 %179
    %182 = vst.msk [vmem:[#allocation3 + $0x8] sm:$0xf] %vm149, %v180
    %v183 = vld [vmem:[#allocation2] sm:$0xf]
    %185 = vrot.lane.b32.xlu0 %v183, 32
    %v186 = vpop.permute.xlu0 %185
    %188 = vst.msk [vmem:[#allocation4 + $0x8] sm:$0xf] %vm149, %v186
    %v189 = vld [vmem:[#allocation2 + $0x4] sm:$0xf]
    %191 = vrot.lane.b32.xlu0 %v189, 96
    %v192 = vpop.permute.xlu0 %191
    %194 = vst.msk [vmem:[#allocation5 + $0x8] sm:$0xf] %vm149, %v192
    %v195 = vld [vmem:[#allocation2] sm:$0xf]
    %197 = vrot.lane.b32.xlu0 %v195, 80
    %v198 = vpop.permute.xlu0 %197
    %200 = vst.msk [vmem:[#allocation3 + $0xc] sm:$0xf] %vm149, %v198
    %v201 = vld [vmem:[#allocation2] sm:$0xf]
    %203 = vrot.lane.b32.xlu0 %v201, 16
    %v204 = vpop.permute.xlu0 %203
    %206 = vst.msk [vmem:[#allocation4 + $0xc] sm:$0xf] %vm149, %v204
    %v207 = vld [vmem:[#allocation2 + $0x4] sm:$0xf]
    %209 = vrot.lane.b32.xlu0 %v207, 80
    %v210 = vpop.permute.xlu0 %209
    %212 = vst.msk [vmem:[#allocation5 + $0xc] sm:$0xf] %vm149, %v210
    %v213 = vld [vmem:[#allocation2 + $0x8] sm:$0xf]
    %214 = vst.msk [vmem:[#allocation3 + $0x10] sm:$0xf] %vm149, %v213
    %v215 = vld [vmem:[#allocation2 + $0x8] sm:$0xf]
    %217 = vrot.lane.b32.xlu0 %v215, 64
    %v218 = vpop.permute.xlu0 %217
    %220 = vst.msk [vmem:[#allocation4 + $0x10] sm:$0xf] %vm149, %v218
    %v221 = vld [vmem:[#allocation2 + $0xc] sm:$0xf]
    %222 = vst.msk [vmem:[#allocation5 + $0x10] sm:$0xf] %vm149, %v221
    %v223 = vld [vmem:[#allocation2 + $0x8] sm:$0xf]
    %225 = vrot.lane.b32.xlu0 %v223, 112
    %v226 = vpop.permute.xlu0 %225
    %228 = vst.msk [vmem:[#allocation3 + $0x14] sm:$0xf] %vm149, %v226
    %v229 = vld [vmem:[#allocation2 + $0x8] sm:$0xf]
    %231 = vrot.lane.b32.xlu0 %v229, 48
    %v232 = vpop.permute.xlu0 %231
    %234 = vst.msk [vmem:[#allocation4 + $0x14] sm:$0xf] %vm149, %v232
    %v235 = vld [vmem:[#allocation2 + $0xc] sm:$0xf]
    %237 = vrot.lane.b32.xlu0 %v235, 112
    %v238 = vpop.permute.xlu0 %237
    %240 = vst.msk [vmem:[#allocation5 + $0x14] sm:$0xf] %vm149, %v238
    %v241 = vld [vmem:[#allocation2 + $0x8] sm:$0xf]
    %243 = vrot.lane.b32.xlu0 %v241, 96
    %v244 = vpop.permute.xlu0 %243
    %246 = vst.msk [vmem:[#allocation3 + $0x18] sm:$0xf] %vm149, %v244
    %v247 = vld [vmem:[#allocation2 + $0x8] sm:$0xf]
    %249 = vrot.lane.b32.xlu0 %v247, 32
    %v250 = vpop.permute.xlu0 %249
    %252 = vst.msk [vmem:[#allocation4 + $0x18] sm:$0xf] %vm149, %v250
    %v253 = vld [vmem:[#allocation2 + $0xc] sm:$0xf]
    %255 = vrot.lane.b32.xlu0 %v253, 96
    %v256 = vpop.permute.xlu0 %255
    %258 = vst.msk [vmem:[#allocation5 + $0x18] sm:$0xf] %vm149, %v256
    %v259 = vld [vmem:[#allocation2 + $0x8] sm:$0xf]
    %261 = vrot.lane.b32.xlu0 %v259, 80
    %v262 = vpop.permute.xlu0 %261
    %264 = vst.msk [vmem:[#allocation3 + $0x1c] sm:$0xf] %vm149, %v262
    %v265 = vld [vmem:[#allocation2 + $0x8] sm:$0xf]
    %267 = vrot.lane.b32.xlu0 %v265, 16
    %v268 = vpop.permute.xlu0 %267
    %270 = vst.msk [vmem:[#allocation4 + $0x1c] sm:$0xf] %vm149, %v268
    %v271 = vld [vmem:[#allocation2 + $0xc] sm:$0xf]
    %273 = vrot.lane.b32.xlu0 %v271, 80
    %v274 = vpop.permute.xlu0 %273
    %276 = vst.msk [vmem:[#allocation5 + $0x1c] sm:$0xf] %vm149, %v274
    %v277 = vld [vmem:[#allocation3] sm:$0xf]
    %v278 = vld [vmem:[#allocation3 + $0x4] sm:$0xf]
    %v279 = vld [vmem:[#allocation3 + $0x8] sm:$0xf]
    %v280 = vld [vmem:[#allocation3 + $0xc] sm:$0xf]
    %v281 = vld [vmem:[#allocation3 + $0x10] sm:$0xf]
    %v282 = vld [vmem:[#allocation3 + $0x14] sm:$0xf]
    %v283 = vld [vmem:[#allocation3 + $0x18] sm:$0xf]
    %v284 = vld [vmem:[#allocation3 + $0x1c] sm:$0xf]
    %v285 = vld [vmem:[#allocation4] sm:$0xf]
    %v286 = vld [vmem:[#allocation4 + $0x4] sm:$0xf]
    %v287 = vld [vmem:[#allocation4 + $0x8] sm:$0xf]
    %v288 = vld [vmem:[#allocation4 + $0xc] sm:$0xf]
    %v289 = vld [vmem:[#allocation4 + $0x10] sm:$0xf]
    %v290 = vld [vmem:[#allocation4 + $0x14] sm:$0xf]
    %v291 = vld [vmem:[#allocation4 + $0x18] sm:$0xf]
    %v292 = vld [vmem:[#allocation4 + $0x1c] sm:$0xf]
    %v301 = vunpack.c.l.b16 %v277
    %v302 = vunpack.c.l.b16 %v278
    %v303 = vunpack.c.l.b16 %v279
    %v304 = vunpack.c.l.b16 %v280
    %v305 = vunpack.c.l.b16 %v281
    %v306 = vunpack.c.l.b16 %v282
    %v307 = vunpack.c.l.b16 %v283
    %v308 = vunpack.c.l.b16 %v284
    %v309 = vpack.c.b16 %v302, %v301
    %v310 = vpack.c.b16 %v304, %v303
    %v311 = vpack.c.b16 %v306, %v305
    %v312 = vpack.c.b16 %v308, %v307
    %v321 = vunpack.c.l.b16 %v285
    %v322 = vunpack.c.l.b16 %v286
    %v323 = vunpack.c.l.b16 %v287
    %v324 = vunpack.c.l.b16 %v288
    %v325 = vunpack.c.l.b16 %v289
    %v326 = vunpack.c.l.b16 %v290
    %v327 = vunpack.c.l.b16 %v291
    %v328 = vunpack.c.l.b16 %v292
    %v329 = vpack.c.b16 %v322, %v321
    %v330 = vpack.c.b16 %v324, %v323
    %v331 = vpack.c.b16 %v326, %v325
    %v332 = vpack.c.b16 %v328, %v327
    %vm333 = vcmask 130048
    %v335 = vsel %vm333, %v309, 0
    %v338 = vsel %vm333, %v310, 0
    %v341 = vsel %vm333, %v311, 0
    %v344 = vsel %vm333, %v312, 0
    %v347 = vsel %vm333, %v329, 0
    %v350 = vsel %vm333, %v330, 0
    %v353 = vsel %vm333, %v331, 0
    %v356 = vsel %vm333, %v332, 0
    %358 = vmatprep.subr.bf16.mxu0 0
    %359 = vmatpush1.bf16.xpose.msra.mxu0 0
    %360 = vmatprep.subr.bf16.mxu0 0
    %361 = vmatpush1.bf16.xpose.msra.mxu0 0
    %362 = vmatprep.subr.bf16.mxu0 0
    %363 = vmatpush1.bf16.xpose.msra.mxu0 0
    %364 = vmatprep.subr.bf16.mxu0 0
    %365 = vmatpush1.bf16.xpose.msra.mxu0 0
    %366 = vmatprep.subr.bf16.mxu0 0
    %367 = vmatpush1.bf16.xpose.msra.mxu0 %v356
    %368 = vmatprep.subr.bf16.mxu0 0
    %369 = vmatpush1.bf16.xpose.msra.mxu0 %v353
    %370 = vmatprep.subr.bf16.mxu0 0
    %371 = vmatpush1.bf16.xpose.msra.mxu0 %v350
    %372 = vmatprep.subr.bf16.mxu0 0
    %373 = vmatpush1.bf16.xpose.msra.mxu0 %v347
    %374 = vmatprep.subr.bf16.mxu0 0
    %375 = vmatpush2.bf16.xpose.msra.mxu0 0
    %376 = vmatprep.subr.bf16.mxu0 0
    %377 = vmatpush2.bf16.xpose.msra.mxu0 0
    %378 = vmatprep.subr.bf16.mxu0 0
    %379 = vmatpush2.bf16.xpose.msra.mxu0 0
    %380 = vmatprep.subr.bf16.mxu0 0
    %381 = vmatpush2.bf16.xpose.msra.mxu0 0
    %382 = vmatprep.subr.bf16.mxu0 0
    %383 = vmatpush2.bf16.xpose.msra.mxu0 0
    %384 = vmatprep.subr.bf16.mxu0 0
    %385 = vmatpush2.bf16.xpose.msra.mxu0 0
    %386 = vmatprep.subr.bf16.mxu0 0
    %387 = vmatpush2.bf16.xpose.msra.mxu0 0
    %388 = vmatprep.subr.bf16.mxu0 0
    %389 = vmatpush2.bf16.xpose.msra.mxu0 0
    %390 = vmatprep.mubr.bf16.mxu0 0
    %391 = vmatmul.mubr.bf16.gmra.mxu0 %v335
    %v392 = vpop.f32.mrf.mxu0
    %v393 = vadd.f32 %v51, %v392
    %v394 = vpop.f32.mrf.mxu0
    %v395 = vpop.f32.mrf.mxu0
    %v396 = vadd.f32 %v52, %v395
    %v397 = vpop.f32.mrf.mxu0
    %398 = vmatprep.mubr.bf16.mxu0 0
    %399 = vmatmul.mubr.bf16.gmra.mxu0 %v338
    %v400 = vpop.f32.mrf.mxu0
    %v401 = vadd.f32 %v53, %v400
    %v402 = vpop.f32.mrf.mxu0
    %v403 = vpop.f32.mrf.mxu0
    %v404 = vadd.f32 %v54, %v403
    %v405 = vpop.f32.mrf.mxu0
    %406 = vmatprep.mubr.bf16.mxu0 0
    %407 = vmatmul.mubr.bf16.gmra.mxu0 %v341
    %v408 = vpop.f32.mrf.mxu0
    %v409 = vadd.f32 %v55, %v408
    %v410 = vpop.f32.mrf.mxu0
    %v411 = vpop.f32.mrf.mxu0
    %v412 = vadd.f32 %v56, %v411
    %v413 = vpop.f32.mrf.mxu0
    %414 = vmatprep.mubr.bf16.mxu0 0
    %415 = vmatmul.mubr.bf16.gmra.mxu0 %v344
    %v416 = vpop.f32.mrf.mxu0
    %v417 = vadd.f32 %v57, %v416
    %v418 = vpop.f32.mrf.mxu0
    %v419 = vpop.f32.mrf.mxu0
    %v420 = vadd.f32 %v58, %v419
    %v421 = vpop.f32.mrf.mxu0
    %422 = vdwg.mxu0
    %vm423 = vcmask 523264
    %v424 = vsel %vm423, %v393, -inf
    %425 = vmax.xlane.f32.xlu0 %v424
    %v426 = vpop.xlane.xlu0 %425
    %v427 = vsel %vm423, %v396, -inf
    %428 = vmax.xlane.f32.xlu0 %v427
    %v429 = vpop.xlane.xlu0 %428
    %v430 = vsel %vm423, %v401, -inf
    %431 = vmax.xlane.f32.xlu0 %v430
    %v432 = vpop.xlane.xlu0 %431
    %v433 = vsel %vm423, %v404, -inf
    %434 = vmax.xlane.f32.xlu0 %v433
    %v435 = vpop.xlane.xlu0 %434
    %v436 = vsel %vm423, %v409, -inf
    %437 = vmax.xlane.f32.xlu0 %v436
    %v438 = vpop.xlane.xlu0 %437
    %v439 = vsel %vm423, %v412, -inf
    %440 = vmax.xlane.f32.xlu0 %v439
    %v441 = vpop.xlane.xlu0 %440
    %v442 = vsel %vm423, %v417, -inf
    %443 = vmax.xlane.f32.xlu0 %v442
    %v444 = vpop.xlane.xlu0 %443
    %v445 = vsel %vm423, %v420, -inf
    %446 = vmax.xlane.f32.xlu0 %v445
    %v447 = vpop.xlane.xlu0 %446
    %v448 = vsub.f32 %v393, %v426
    %v449 = vsub.f32 %v396, %v429
    %v450 = vsub.f32 %v401, %v432
    %v451 = vsub.f32 %v404, %v435
    %v452 = vsub.f32 %v409, %v438
    %v453 = vsub.f32 %v412, %v441
    %v454 = vsub.f32 %v417, %v444
    %v455 = vsub.f32 %v420, %v447
    %v456 = vmul.f32 %v448, 1.442695
    %v457 = vpow.pop %v456
    %v458 = vmul.f32 %v449, 1.442695
    %v459 = vpow.pop %v458
    %v460 = vmul.f32 %v450, 1.442695
    %v461 = vpow.pop %v460
    %v462 = vmul.f32 %v451, 1.442695
    %v463 = vpow.pop %v462
    %v464 = vmul.f32 %v452, 1.442695
    %v465 = vpow.pop %v464
    %v466 = vmul.f32 %v453, 1.442695
    %v467 = vpow.pop %v466
    %v468 = vmul.f32 %v454, 1.442695
    %v469 = vpow.pop %v468
    %v470 = vmul.f32 %v455, 1.442695
    %v471 = vpow.pop %v470
    %v472 = vsel %vm423, %v457, 0.0
    %473 = vadd.xlane.f32.xlu0 %v472
    %v474 = vpop.xlane.xlu0 %473
    %v475 = vsel %vm423, %v459, 0.0
    %476 = vadd.xlane.f32.xlu0 %v475
    %v477 = vpop.xlane.xlu0 %476
    %v478 = vsel %vm423, %v461, 0.0
    %479 = vadd.xlane.f32.xlu0 %v478
    %v480 = vpop.xlane.xlu0 %479
    %v481 = vsel %vm423, %v463, 0.0
    %482 = vadd.xlane.f32.xlu0 %v481
    %v483 = vpop.xlane.xlu0 %482
    %v484 = vsel %vm423, %v465, 0.0
    %485 = vadd.xlane.f32.xlu0 %v484
    %v486 = vpop.xlane.xlu0 %485
    %v487 = vsel %vm423, %v467, 0.0
    %488 = vadd.xlane.f32.xlu0 %v487
    %v489 = vpop.xlane.xlu0 %488
    %v490 = vsel %vm423, %v469, 0.0
    %491 = vadd.xlane.f32.xlu0 %v490
    %v492 = vpop.xlane.xlu0 %491
    %v493 = vsel %vm423, %v471, 0.0
    %494 = vadd.xlane.f32.xlu0 %v493
    %v495 = vpop.xlane.xlu0 %494
    %v496 = vrcp.pop %v474
    %v497 = vrcp.pop %v477
    %v498 = vrcp.pop %v480
    %v499 = vrcp.pop %v483
    %v500 = vrcp.pop %v486
    %v501 = vrcp.pop %v489
    %v502 = vrcp.pop %v492
    %v503 = vrcp.pop %v495
    %v504 = vmul.f32 %v457, %v496
    %v505 = vmul.f32 %v459, %v497
    %v506 = vmul.f32 %v461, %v498
    %v507 = vmul.f32 %v463, %v499
    %v508 = vmul.f32 %v465, %v500
    %v509 = vmul.f32 %v467, %v501
    %v510 = vmul.f32 %v469, %v502
    %v511 = vmul.f32 %v471, %v503
    %v512 = vpack.c.bf16 %v505, %v504
    %v513 = vpack.c.bf16 %v507, %v506
    %v514 = vpack.c.bf16 %v509, %v508
    %v515 = vpack.c.bf16 %v511, %v510
    %v516 = vld [vmem:[#allocation5] sm:$0xf]
    %v517 = vld [vmem:[#allocation5 + $0x4] sm:$0xf]
    %v518 = vld [vmem:[#allocation5 + $0x8] sm:$0xf]
    %v519 = vld [vmem:[#allocation5 + $0xc] sm:$0xf]
    %v520 = vld [vmem:[#allocation5 + $0x10] sm:$0xf]
    %v521 = vld [vmem:[#allocation5 + $0x14] sm:$0xf]
    %v522 = vld [vmem:[#allocation5 + $0x18] sm:$0xf]
    %v523 = vld [vmem:[#allocation5 + $0x1c] sm:$0xf]
    %v532 = vunpack.c.l.b16 %v516
    %v533 = vunpack.c.l.b16 %v517
    %v534 = vunpack.c.l.b16 %v518
    %v535 = vunpack.c.l.b16 %v519
    %v536 = vunpack.c.l.b16 %v520
    %v537 = vunpack.c.l.b16 %v521
    %v538 = vunpack.c.l.b16 %v522
    %v539 = vunpack.c.l.b16 %v523
    %v540 = vpack.c.b16 %v533, %v532
    %v541 = vpack.c.b16 %v535, %v534
    %v542 = vpack.c.b16 %v537, %v536
    %v543 = vpack.c.b16 %v539, %v538
    %v549 = vsel %vm423, %v512, 0
    %v552 = vsel %vm423, %v513, 0
    %v555 = vsel %vm423, %v514, 0
    %v558 = vsel %vm423, %v515, 0
    %560 = vmatprep.subr.bf16.mxu0 0
    %561 = vmatpush1.bf16.msra.mxu0 0
    %562 = vmatprep.subr.bf16.mxu0 0
    %563 = vmatpush1.bf16.msra.mxu0 0
    %564 = vmatprep.subr.bf16.mxu0 0
    %565 = vmatpush1.bf16.msra.mxu0 0
    %566 = vmatprep.subr.bf16.mxu0 0
    %567 = vmatpush1.bf16.msra.mxu0 0
    %568 = vmatprep.subr.bf16.mxu0 0
    %569 = vmatpush1.bf16.msra.mxu0 %v543
    %570 = vmatprep.subr.bf16.mxu0 0
    %571 = vmatpush1.bf16.msra.mxu0 %v542
    %572 = vmatprep.subr.bf16.mxu0 0
    %573 = vmatpush1.bf16.msra.mxu0 %v541
    %574 = vmatprep.subr.bf16.mxu0 0
    %575 = vmatpush1.bf16.msra.mxu0 %v540
    %576 = vmatprep.subr.bf16.mxu0 0
    %577 = vmatpush2.bf16.msra.mxu0 0
    %578 = vmatprep.subr.bf16.mxu0 0
    %579 = vmatpush2.bf16.msra.mxu0 0
    %580 = vmatprep.subr.bf16.mxu0 0
    %581 = vmatpush2.bf16.msra.mxu0 0
    %582 = vmatprep.subr.bf16.mxu0 0
    %583 = vmatpush2.bf16.msra.mxu0 0
    %584 = vmatprep.subr.bf16.mxu0 0
    %585 = vmatpush2.bf16.msra.mxu0 0
    %586 = vmatprep.subr.bf16.mxu0 0
    %587 = vmatpush2.bf16.msra.mxu0 0
    %588 = vmatprep.subr.bf16.mxu0 0
    %589 = vmatpush2.bf16.msra.mxu0 0
    %590 = vmatprep.subr.bf16.mxu0 0
    %591 = vmatpush2.bf16.msra.mxu0 0
    %592 = vmatprep.mubr.bf16.mxu0 0
    %593 = vmatmul.mubr.bf16.gmra.mxu0 %v549
    %v594 = vpop.f32.mrf.mxu0
    %v595 = vadd.f32 0.0, %v594
    %v596 = vpop.f32.mrf.mxu0
    %v597 = vpop.f32.mrf.mxu0
    %v598 = vadd.f32 0.0, %v597
    %v599 = vpop.f32.mrf.mxu0
    %600 = vmatprep.mubr.bf16.mxu0 0
    %601 = vmatmul.mubr.bf16.gmra.mxu0 %v552
    %v602 = vpop.f32.mrf.mxu0
    %v603 = vadd.f32 0.0, %v602
    %v604 = vpop.f32.mrf.mxu0
    %v605 = vpop.f32.mrf.mxu0
    %v606 = vadd.f32 0.0, %v605
    %v607 = vpop.f32.mrf.mxu0
    %608 = vmatprep.mubr.bf16.mxu0 0
    %609 = vmatmul.mubr.bf16.gmra.mxu0 %v555
    %v610 = vpop.f32.mrf.mxu0
    %v611 = vadd.f32 0.0, %v610
    %v612 = vpop.f32.mrf.mxu0
    %v613 = vpop.f32.mrf.mxu0
    %v614 = vadd.f32 0.0, %v613
    %v615 = vpop.f32.mrf.mxu0
    %616 = vmatprep.mubr.bf16.mxu0 0
    %617 = vmatmul.mubr.bf16.gmra.mxu0 %v558
    %v618 = vpop.f32.mrf.mxu0
    %v619 = vadd.f32 0.0, %v618
    %v620 = vpop.f32.mrf.mxu0
    %v621 = vpop.f32.mrf.mxu0
    %v622 = vadd.f32 0.0, %v621
    %v623 = vpop.f32.mrf.mxu0
    %624 = vdwg.mxu0
    %v625 = vpack.c.bf16 %v595, %v595
    %626 = vst.msk [vmem:[#allocation6] sm:$0xf] %vm149, %v625
    %v627 = vpack.c.bf16 %v598, %v598
    %v629 = vunpack.c.l.b16 %v627
    %v630 = vpack.c.b16 %v629, %v629
    %631 = vrot.lane.b32.xlu0 %v630, 16
    %v632 = vpop.permute.xlu0 %631
    %vm634 = vcmask 257152
    %635 = vst.msk [vmem:[#allocation6] sm:$0xf] %vm634, %v632
    %v636 = vpack.c.bf16 %v603, %v603
    %v638 = vunpack.c.l.b16 %v636
    %v639 = vpack.c.b16 %v638, %v638
    %640 = vrot.lane.b32.xlu0 %v639, 32
    %v641 = vpop.permute.xlu0 %640
    %vm643 = vcmask 388352
    %644 = vst.msk [vmem:[#allocation6] sm:$0xf] %vm643, %v641
    %v645 = vpack.c.bf16 %v606, %v606
    %v647 = vunpack.c.l.b16 %v645
    %v648 = vpack.c.b16 %v647, %v647
    %649 = vrot.lane.b32.xlu0 %v648, 48
    %v650 = vpop.permute.xlu0 %649
    %vm652 = vcmask 519552
    %653 = vst.msk [vmem:[#allocation6] sm:$0xf] %vm652, %v650
    %v654 = vpack.c.bf16 %v611, %v611
    %655 = vst.msk [vmem:[#allocation6 + $0x4] sm:$0xf] %vm149, %v654
    %v656 = vpack.c.bf16 %v614, %v614
    %v658 = vunpack.c.l.b16 %v656
    %v659 = vpack.c.b16 %v658, %v658
    %660 = vrot.lane.b32.xlu0 %v659, 16
    %v661 = vpop.permute.xlu0 %660
    %663 = vst.msk [vmem:[#allocation6 + $0x4] sm:$0xf] %vm634, %v661
    %v664 = vpack.c.bf16 %v619, %v619
    %v666 = vunpack.c.l.b16 %v664
    %v667 = vpack.c.b16 %v666, %v666
    %668 = vrot.lane.b32.xlu0 %v667, 32
    %v669 = vpop.permute.xlu0 %668
    %671 = vst.msk [vmem:[#allocation6 + $0x4] sm:$0xf] %vm643, %v669
    %v672 = vpack.c.bf16 %v622, %v622
    %v674 = vunpack.c.l.b16 %v672
    %v675 = vpack.c.b16 %v674, %v674
    %676 = vrot.lane.b32.xlu0 %v675, 48
    %v677 = vpop.permute.xlu0 %676
    %679 = vst.msk [vmem:[#allocation6 + $0x4] sm:$0xf] %vm652, %v677
    %v680 = vld [vmem:[#allocation6] sm:$0xf]
    %v681 = vld [vmem:[#allocation6 + $0x4] sm:$0xf]
    %v683 = vlaneseq
    %v684 = vshrl.u32 %v683, 7
    %v685 = vsub.s32 0, %v684
    %v686 = vrot.slane %v50, %v685
    %v690 = vunpack.c.l.b16 %v680
    %v691 = vunpack.c.l.b16 %v681
    %v692 = vpack.c.b16 %v691, %v690
    %v701 = vunpack.c.l.b16 %v42
    %v702 = vunpack.c.l.b16 %v43
    %v703 = vunpack.c.l.b16 %v44
    %v704 = vunpack.c.l.b16 %v45
    %v705 = vunpack.c.l.b16 %v46
    %v706 = vunpack.c.l.b16 %v47
    %v707 = vunpack.c.l.b16 %v48
    %v708 = vunpack.c.l.b16 %v49
    %v709 = vpack.c.b16 %v702, %v701
    %v710 = vpack.c.b16 %v704, %v703
    %v711 = vpack.c.b16 %v706, %v705
    %v712 = vpack.c.b16 %v708, %v707
    %v718 = vsel %vm423, %v692, 0
    %720 = vmatprep.subr.bf16.mxu0 0
    %721 = vmatpush1.bf16.msra.mxu0 0
    %722 = vmatprep.subr.bf16.mxu0 0
    %723 = vmatpush1.bf16.msra.mxu0 0
    %724 = vmatprep.subr.bf16.mxu0 0
    %725 = vmatpush1.bf16.msra.mxu0 0
    %726 = vmatprep.subr.bf16.mxu0 0
    %727 = vmatpush1.bf16.msra.mxu0 0
    %728 = vmatprep.subr.bf16.mxu0 0
    %729 = vmatpush1.bf16.msra.mxu0 %v712
    %730 = vmatprep.subr.bf16.mxu0 0
    %731 = vmatpush1.bf16.msra.mxu0 %v711
    %732 = vmatprep.subr.bf16.mxu0 0
    %733 = vmatpush1.bf16.msra.mxu0 %v710
    %734 = vmatprep.subr.bf16.mxu0 0
    %735 = vmatpush1.bf16.msra.mxu0 %v709
    %736 = vmatprep.subr.bf16.mxu0 0
    %737 = vmatpush2.bf16.msra.mxu0 0
    %738 = vmatprep.subr.bf16.mxu0 0
    %739 = vmatpush2.bf16.msra.mxu0 0
    %740 = vmatprep.subr.bf16.mxu0 0
    %741 = vmatpush2.bf16.msra.mxu0 0
    %742 = vmatprep.subr.bf16.mxu0 0
    %743 = vmatpush2.bf16.msra.mxu0 0
    %744 = vmatprep.subr.bf16.mxu0 0
    %745 = vmatpush2.bf16.msra.mxu0 0
    %746 = vmatprep.subr.bf16.mxu0 0
    %747 = vmatpush2.bf16.msra.mxu0 0
    %748 = vmatprep.subr.bf16.mxu0 0
    %749 = vmatpush2.bf16.msra.mxu0 0
    %750 = vmatprep.subr.bf16.mxu0 0
    %751 = vmatpush2.bf16.msra.mxu0 0
    %752 = vmatprep.mubr.bf16.mxu0 0
    %753 = vmatmul.mubr.bf16.gmra.mxu0 %v718
    %v754 = vpop.f32.mrf.mxu0
    %v755 = vadd.f32 %v686, %v754
    %v756 = vpop.f32.mrf.mxu0
    %v757 = vpop.f32.mrf.mxu0
    %v758 = vadd.f32 %v686, %v757
    %v759 = vpop.f32.mrf.mxu0
    %760 = vdwg.mxu0
    %761 = vst.msk [vmem:[#allocation10] sm:$0xff] %vm84, %v755
    %762 = vst.msk [vmem:[#allocation10 + $0x8] sm:$0xff] %vm84, %v758
    // Predicated region
    $region26: #{tpu_custom_call.1} parent=1 // pred_check
      _
    $region27: #{tpu_custom_call.1} parent=1 // pred_check_branch
      %764 = sbr.rel (0) target = $region29
    $region28: #{tpu_custom_call.1} parent=1 // pred_region
      %s766 = ssub.s32 256, 256
      %767 = vsyncadd [#allocation9], %s766
      %s768 = sshll.u32 [#allocation10], 4
      %s769 = int_to_ptr.vmem [resolvable:$true] %s768
      %774 = dma.vmem_to_hbm [thread:$0]  %s769, 256, %s5, [#allocation9], 128, 128, 8
    $region29: #{tpu_custom_call.1} parent=1 // pred_fallthru
      _
    // Predicated region
    $region30: #{tpu_custom_call.1} parent=1 // pred_check
      _
    $region31: #{tpu_custom_call.1} parent=1 // pred_check_branch
      %776 = sbr.rel (0) target = $region33
    $region32: #{tpu_custom_call.1} parent=1 // pred_region
      %777 = dma.done [#allocation9], 256
    $region33: #{tpu_custom_call.1} parent=1 // pred_fallthru
      _
    %778 = vsyncpa [#allocation8], 1
    %779 = vsyncpa [#allocation9], 1

</llo_original>
